<compile_context>
chip_gen: v7x
topology: tpu7x:2x2x1
jax: 0.10.0
libtpu: 0.0.40
codegen_flags: <defaults>
</compile_context>

<pallas_src>
import jax
import jax.numpy as jnp
from jax.experimental import pallas as pl
from jax.experimental.pallas import tpu as pltpu

EPS = 1e-5   # PyTorch BatchNorm2d default eps
LANE = 128   # TPU lane width


def _round_up(x, m):
    return (x + m - 1) // m * m


# ----------------------------- kernel ----------------------------------------


def _bn_relu_pool_conv_kernel(x_ref, scale_ref, shift_ref, w_ref, o_ref):
    # x_ref:       (TM, 4*Cin) bf16 — each row = one OUTPUT pixel's four 2x2
    #                                  pooling taps concatenated channel-wise
    # scale/shift: (1, 4*Cin)  f32  — folded BN affine, tiled over the 4 taps
    # w_ref:       (4*Cin, Cpo) bf16 — 1x1-conv weight replicated per tap * 0.25
    # o_ref:       (TM, Cpo)   f32
    x = x_ref[...].astype(jnp.float32)            # BN+ReLU in f32 (v5e VPU path)
    a = jnp.maximum(x * scale_ref[...] + shift_ref[...], 0.0)
    o_ref[...] = jnp.dot(a.astype(jnp.bfloat16), w_ref[...],
                         preferred_element_type=jnp.float32).astype(o_ref.dtype)


# ----------------------------- tiling helpers ---------------------------------


def _vmem_budget():
    # Derive the tile budget / vmem limit from the chip's physical VMEM
    # (128 MiB on v5e/v6e, 64 MiB per TensorCore on v7x).  Conservative
    # fallback if the query is unavailable.
    try:
        cap = int(pltpu.get_tpu_info().vmem_capacity_bytes)
    except Exception:  # pragma: no cover - defensive fallback
        cap = 64 * 1024 * 1024
    limit = min(cap * 3 // 4, 96 * 1024 * 1024)
    budget = limit - 4 * 1024 * 1024          # headroom for Mosaic internals
    return budget, limit


def _pick_tile_m(m_rows, k, n_out, budget_bytes):
    # Resident operands, conservatively counted as double-buffered even with a
    # constant index map: bf16 weight (k, n_out) + 2x f32 (1, k) scale/shift.
    fixed = 2 * (2 * k * n_out + 2 * 4 * k)
    # Per output row, double-buffered: bf16 input row (k) + f32 output row (n).
    per_row = 2 * (2 * k + 4 * n_out)
    avail = max(budget_bytes - fixed, 8 * per_row)
    tm = min(1024, avail // per_row, m_rows)
    # Keep >= ~16 grid steps so the "parallel" axis can be sharded across
    # v7x's two TensorCores and the pipeline always has work to overlap.
    tm = min(tm, max(8, _round_up(pl.cdiv(m_rows, 16), 8)))
    return max(8, (int(tm) // 8) * 8)


# ----------------------------- wrapper ----------------------------------------


@jax.jit
def transition_block(x_nchw, params):
    N, Cin, H, W = x_nchw.shape
    assert H % 2 == 0 and W % 2 == 0, "AvgPool2d(2,2) path assumes even H, W"
    w = params["w"]                       # (Cout, Cin, 1, 1)  PyTorch OIHW
    gamma, beta = params["gamma"], params["beta"]
    Cout = w.shape[0]
    Ho, Wo = H // 2, W // 2
    M = N * Ho * Wo
    K = 4 * Cin
    Cpo = _round_up(Cout, LANE)

    # ---- training-mode BN statistics: one fused f32 pass over x ----
    xf = x_nchw.astype(jnp.float32)
    cnt = N * H * W
    s1 = jnp.sum(xf, axis=(0, 2, 3))
    s2 = jnp.sum(jnp.square(xf), axis=(0, 2, 3))
    mean = s1 / cnt
    var = jnp.maximum(s2 / cnt - jnp.square(mean), 0.0)
    scale = gamma.astype(jnp.float32) / jnp.sqrt(var + EPS)
    shift = beta.astype(jnp.float32) - mean * scale

    # Single rearrangement: NCHW -> one row per OUTPUT pixel holding its four
    # 2x2 pooling taps, channels last.  Stored in HBM as bf16.
    # (n, c, 2*ho+r, 2*wo+s) -> row (n,ho,wo), tap (r,s), channel c.
    x_taps = jnp.transpose(
        xf.reshape(N, Cin, Ho, 2, Wo, 2), (0, 2, 4, 3, 5, 1)
    ).reshape(M, K).astype(jnp.bfloat16)

    budget, vmem_limit = _vmem_budget()
    TM = _pick_tile_m(M, K, Cpo, budget)
    Mp = _round_up(M, TM)
    x_p = jnp.pad(x_taps, ((0, Mp - M), (0, 0)))

    scale4 = jnp.tile(scale, 4)[None, :]                            # (1, K) f32
    shift4 = jnp.tile(shift, 4)[None, :]                            # (1, K) f32

    wm = jnp.transpose(w[:, :, 0, 0], (1, 0)).astype(jnp.float32)   # (Cin, Cout)
    wm = jnp.pad(wm, ((0, 0), (0, Cpo - Cout)))                     # lane-pad out
    w4 = (jnp.tile(wm, (4, 1)) * 0.25).astype(jnp.bfloat16)         # (K, Cpo)

    grid = (Mp // TM,)
    y = pl.pallas_call(
        _bn_relu_pool_conv_kernel,
        out_shape=jax.ShapeDtypeStruct((Mp, Cpo), jnp.float32),
        grid=grid,
        in_specs=[
            pl.BlockSpec((TM, K), lambda i: (i, 0)),
            pl.BlockSpec((1, K), lambda i: (0, 0)),
            pl.BlockSpec((1, K), lambda i: (0, 0)),
            pl.BlockSpec((K, Cpo), lambda i: (0, 0)),
        ],
        out_specs=pl.BlockSpec((TM, Cpo), lambda i: (i, 0)),
        compiler_params=pltpu.CompilerParams(
            dimension_semantics=("parallel",),
            vmem_limit_bytes=vmem_limit,
        ),
    )(x_p, scale4, shift4, w4)

    # TODO(synk): if the downstream consumer accepts NHWC (channels-last),
    # return `out` directly and skip this extra output-sized HBM pass.
    out = y[:M, :Cout].reshape(N, Ho, Wo, Cout)
    return jnp.transpose(out, (0, 3, 1, 2))      # back to NCHW


# ----------------------------- reference (pure JAX) ---------------------------


def reference_forward(x_nchw, params):
    g, b, w = params["gamma"], params["beta"], params["w"]
    mean = jnp.mean(x_nchw, axis=(0, 2, 3), keepdims=True)
    var = jnp.mean(jnp.square(x_nchw - mean), axis=(0, 2, 3), keepdims=True)
    a = jax.nn.relu((x_nchw - mean) / jnp.sqrt(var + EPS)
                    * g.reshape(1, -1, 1, 1) + b.reshape(1, -1, 1, 1))
    y = jax.lax.conv_general_dilated(
        a, w, (1, 1), "VALID",
        dimension_numbers=("NCHW", "OIHW", "NCHW"),
        precision=jax.lax.Precision.HIGHEST)
    N, Cout, H, W = y.shape
    return jnp.mean(y.reshape(N, Cout, H // 2, 2, W // 2, 2), axis=(3, 5))


# ----------------------------- main -------------------------------------------


if __name__ == "__main__":
    key = jax.random.PRNGKey(0)
    k_x, k_g, k_b, k_w = jax.random.split(key, 4)

    N, Cin, Cout, H, W = 2, 4, 4, 16, 16

    x = jax.random.normal(k_x, (N, Cin, H, W), jnp.float32)
    params = dict(
        gamma=1.0 + 0.1 * jax.random.normal(k_g, (Cin,), jnp.float32),
        beta=0.1 * jax.random.normal(k_b, (Cin,), jnp.float32),
        w=jax.random.normal(k_w, (Cout, Cin, 1, 1), jnp.float32) / (Cin ** 0.5),
    )

    out = jax.block_until_ready(transition_block(x, params))
    ref = jax.block_until_ready(reference_forward(x, params))

    assert out.shape == (N, Cout, H // 2, W // 2), out.shape
    if not jnp.allclose(out, ref, atol=2e-2, rtol=2e-2):
        raise RuntimeError(
            f"mismatch vs reference, max abs err = {jnp.max(jnp.abs(out - ref))}")
    print("KERNEL_OK")
</pallas_src>

<mosaic_0001>
module attributes {stable_mosaic.version = 11 : i64} {
  func.func @_bn_relu_pool_conv_kernel(%arg0: i32, %arg1: memref<8x16xbf16, #tpu.memory_space<vmem>>, %arg2: memref<1x16xf32, #tpu.memory_space<vmem>>, %arg3: memref<1x16xf32, #tpu.memory_space<vmem>>, %arg4: memref<16x128xbf16, #tpu.memory_space<vmem>>, %arg5: memref<8x128xf32, #tpu.memory_space<vmem>>) attributes {dimension_semantics = [#tpu.dimension_semantics<parallel>], iteration_bounds = array<i64: 16>, scalar_prefetch = 0 : i64, scratch_operands = 0 : i64, tpu.core_type = #tpu.core_type<tc>, window_params = [{transform_indices = @transform_0, window_bounds = array<i64: 8, 16>}, {pipeline_mode = #tpu.pipeline_mode<synchronous>, transform_indices = @transform_1, window_bounds = array<i64: 1, 16>}, {pipeline_mode = #tpu.pipeline_mode<synchronous>, transform_indices = @transform_2, window_bounds = array<i64: 1, 16>}, {pipeline_mode = #tpu.pipeline_mode<synchronous>, transform_indices = @transform_3, window_bounds = array<i64: 16, 128>}, {transform_indices = @transform_4, window_bounds = array<i64: 8, 128>}]} {
    %c0 = arith.constant 0 : index
    %c0_0 = arith.constant 0 : index
    %0 = vector.load %arg1[%c0, %c0_0] : memref<8x16xbf16, #tpu.memory_space<vmem>>, vector<8x16xbf16>
    %1 = arith.extf %0 : vector<8x16xbf16> to vector<8x16xf32>
    %c0_1 = arith.constant 0 : index
    %c0_2 = arith.constant 0 : index
    %2 = vector.load %arg2[%c0_1, %c0_2] : memref<1x16xf32, #tpu.memory_space<vmem>>, vector<1x16xf32>
    %3 = vector.broadcast %2 : vector<1x16xf32> to vector<8x16xf32>
    %4 = arith.mulf %1, %3 : vector<8x16xf32>
    %c0_3 = arith.constant 0 : index
    %c0_4 = arith.constant 0 : index
    %5 = vector.load %arg3[%c0_3, %c0_4] : memref<1x16xf32, #tpu.memory_space<vmem>>, vector<1x16xf32>
    %6 = vector.broadcast %5 : vector<1x16xf32> to vector<8x16xf32>
    %7 = arith.addf %4, %6 : vector<8x16xf32>
    %cst = arith.constant 0.000000e+00 : f32
    %8 = vector.broadcast %cst : f32 to vector<8x16xf32>
    %9 = arith.maximumf %7, %8 : vector<8x16xf32>
    %10 = arith.truncf %9 : vector<8x16xf32> to vector<8x16xbf16>
    %c0_5 = arith.constant 0 : index
    %c0_6 = arith.constant 0 : index
    %11 = vector.load %arg4[%c0_5, %c0_6] : memref<16x128xbf16, #tpu.memory_space<vmem>>, vector<16x128xbf16>
    %cst_7 = arith.constant dense<0.000000e+00> : vector<8x128xf32>
    %12 = tpu.matmul %10, %11, %cst_7 {dimension_numbers = #tpu.dot_dimension_numbers<[1], [0], [0], [1], [0, 0, 1, 1], [], []>} : vector<8x16xbf16>, vector<16x128xbf16>, vector<8x128xf32> -> vector<8x128xf32>
    %c0_8 = arith.constant 0 : index
    %c0_9 = arith.constant 0 : index
    %13 = vector.load %arg5[%c0_8, %c0_9] : memref<8x128xf32, #tpu.memory_space<vmem>>, vector<8x128xf32>
    tpu.vector_store %arg5[%c0_8, %c0_9], %12 {strides = array<i32>} : memref<8x128xf32, #tpu.memory_space<vmem>>, vector<8x128xf32>,
    return
  }
  func.func @transform_0(%arg0: i32) -> (i32, i32) {
    %c0_i32 = arith.constant 0 : i32
    %c0_i32_0 = arith.constant 0 : i32
    return %arg0, %c0_i32 : i32, i32
  }
  func.func @transform_1(%arg0: i32) -> (i32, i32) {
    %c0_i32 = arith.constant 0 : i32
    %c0_i32_0 = arith.constant 0 : i32
    %c0_i32_1 = arith.constant 0 : i32
    return %c0_i32, %c0_i32_0 : i32, i32
  }
  func.func @transform_2(%arg0: i32) -> (i32, i32) {
    %c0_i32 = arith.constant 0 : i32
    %c0_i32_0 = arith.constant 0 : i32
    %c0_i32_1 = arith.constant 0 : i32
    return %c0_i32, %c0_i32_0 : i32, i32
  }
  func.func @transform_3(%arg0: i32) -> (i32, i32) {
    %c0_i32 = arith.constant 0 : i32
    %c0_i32_0 = arith.constant 0 : i32
    %c0_i32_1 = arith.constant 0 : i32
    return %c0_i32, %c0_i32_0 : i32, i32
  }
  func.func @transform_4(%arg0: i32) -> (i32, i32) {
    %c0_i32 = arith.constant 0 : i32
    %c0_i32_0 = arith.constant 0 : i32
    return %arg0, %c0_i32 : i32, i32
  }
}

</mosaic_0001>

<llo_original>
// kernel: tile.18
$region0: #{tile.18}
  #allocation0 [shape = 's32[1]{0}', space=sflag, size = 0x4, scoped, tag = 'scoped memory for tile.18']
  %s0 = inlined_call_operand.vmem [shape: f32[4], index: 0, kind: input, shape index: {}]
  %s1 = inlined_call_operand.vmem [shape: f32[4,4], index: 1, kind: output, shape index: {}]
  // Predicated region
  $region2: #{tile.18} parent=0 // pred_check
    _
  $region3: #{tile.18} parent=0 // pred_check_branch
    %3 = sbr.rel (0) target = $region5
  $region4: #{tile.18} parent=0 // pred_region
    _
  $region5: #{tile.18} parent=0 // pred_fallthru
    _
  %v4 = vld [vmem:[%s0] ss:$0 sm:$0xff]
  %5 = vst [vmem:[%s1] sm:$0xf] %v4

// kernel: tile.19
$region0: #{tile.19}
  %s0 = inlined_call_operand.vmem [shape: f32[4,4], index: 0, kind: input, shape index: {}]
  %s1 = inlined_call_operand.vmem [shape: f32[1,16], index: 1, kind: output, shape index: {}]
  $region1: #{tile.19} parent=0
    #allocation0 [shape = 'u8[4096]{0}', space=vmem, size = 0x1000, scoped, tag = 'scoped mem for output reshape']
    #allocation1 [shape = 'u8[4096]{0}', space=vmem, size = 0x1000, scoped, tag = 'scoped mem for input reshape']
    %s3 = sshllo.u32 0, 4
    %v4 = vld [vmem:[%s0] sm:%s3]
    %5 = vst [vmem:[#allocation1] sm:%s3] %v4
    %v6 = vld [vmem:[#allocation1] sm:$0x1]
    %vm7 = vcmask 31744
    %8 = vst.msk [vmem:[#allocation0] sm:$0x1] %vm7, %v6
    %s9 = scalar_lea.vmem [#allocation1], 3
    %v10 = vld [vmem:[%s9] sm:$0x1]
    %11 = vrot.lane.b32.xlu0 %v10, 12
    %v12 = vpop.permute.xlu0 %11
    %vm13 = vcmask 130144
    %14 = vst.msk [vmem:[#allocation0] sm:$0x1] %vm13, %v12
    %s15 = scalar_lea.vmem [#allocation1], 2
    %v16 = vld [vmem:[%s15] sm:$0x1]
    %17 = vrot.lane.b32.xlu0 %v16, 8
    %v18 = vpop.permute.xlu0 %17
    %vm19 = vcmask 97344
    %20 = vst.msk [vmem:[#allocation0] sm:$0x1] %vm19, %v18
    %s21 = scalar_lea.vmem [#allocation1], 1
    %v22 = vld [vmem:[%s21] sm:$0x1]
    %23 = vrot.lane.b32.xlu0 %v22, 4
    %v24 = vpop.permute.xlu0 %23
    %vm25 = vcmask 64544
    %26 = vst.msk [vmem:[#allocation0] sm:$0x1] %vm25, %v24
    %s28 = sshllo.u32 0, 1
    %v30 = vld [vmem:[#allocation0] sm:%s28]
    %s31 = sshllo.u32 0, 1
    %32 = vst [vmem:[%s1] sm:%s31] %v30

// kernel: transition_block.1
$region0: #{transition_block.1}
  #allocation0 [shape = 'u32[]', space=smem, size = 0x4, offset = 0x4, fixed_abs, tag = 'smem constant byte address 0x4 - core index']
  #allocation1 [shape = 'u32[144,128]{1,0:T(1,128)}', space=vmem, size = 0x12000, scoped, tag = 'internal scratch']
  %s0 = inlined_call_operand.vmem [shape: bf16[128,16], index: 0, kind: input, shape index: {}]
  %s1 = inlined_call_operand.vmem [shape: f32[1,16], index: 1, kind: input, shape index: {}]
  %s2 = inlined_call_operand.vmem [shape: f32[1,16], index: 2, kind: input, shape index: {}]
  %s3 = inlined_call_operand.vmem [shape: bf16[16,128], index: 3, kind: input, shape index: {}]
  %s4 = inlined_call_operand.vmem [shape: f32[128,128], index: 4, kind: output, shape index: {}]
  %s5 = sld [smem:[#allocation0]]
  $region49: #{transition_block.1} parent=0
    _
  %s7 = ssub.s32 1, %s5
  %s8 = scalar_select 0, %s7, %s5
  loop: start=0, step=1, limit=18
  $region2: #{transition_block.1} parent=0 // loop_pre_header
    _
  $region3: #{transition_block.1} parent=0 // loop_header
    %s10 = sphi 0, %s14
    %p11 = scmp.ge.s32.totalorder %s10, 18
    %s20 = sphi 0, %s22
    %s23 = sphi 0, %s20
    %s24 = sphi 0, %s23
    %s40 = sphi 0, %s24
    %s44 = sphi 0, %s44
    %s46 = sphi 0, %s44
    %s47 = sphi 0, %s46
    %s61 = sphi 0, %s47
    %s65 = sphi 0, %s65
    %s67 = sphi 0, %s65
    %s68 = sphi 0, %s67
    %s82 = sphi 0, %s68
    %s86 = sphi 0, %s86
    %s88 = sphi 0, %s86
    %s89 = sphi 0, %s88
    %s103 = sphi 0, %s89
    %s109 = sphi 0, %s111
    %s112 = sphi 0, %s109
    %s113 = sphi 0, %s112
    %s129 = sphi 0, %s113
  $region4: #{transition_block.1} parent=0 // loop_header_branch
    %13 = sbr.rel (%p11) target = $region8
  $region5: #{transition_block.1} parent=0 // loop_body
    %s15 = ssub.s32 %s10, 1
    %s16 = ssub.s32 %s10, 2
    %s17 = sadd.s32 %s10, 1
    %s18 = ssub.s32 %s10, %s17
    %p19 = scmp.eq.s32.totalorder %s18, 0
    %s21 = sadd.s32 %s20, 1
    %s22 = scalar_select %p19, %s20, %s21
    %p25 = pneg %p19
    %p26 = scmp.eq.s32.totalorder %s10, 15
    %p27 = por %p25, %p26
    %p28 = scmp.ne.s32.totalorder %s20, %s23
    %p29 = scmp.eq.s32.totalorder %s10, 0
    %p30 = por %p28, %p29
    %p31 = scmp.ne.s32.totalorder %s20, %s23
    %p32 = scmp.eq.s32.totalorder %s15, 15
    %p33 = por %p31, %p32
    %p34 = scmp.ne.s32.totalorder %s23, %s24
    %p35 = scmp.eq.s32.totalorder %s15, 0
    %p36 = por %p34, %p35
    %p37 = scmp.ne.s32.totalorder %s23, %s24
    %p38 = scmp.eq.s32.totalorder %s16, 15
    %p39 = por %p37, %p38
    %p41 = scmp.ne.s32.totalorder %s24, %s40
    %p42 = scmp.eq.s32.totalorder %s16, 0
    %p43 = por %p41, %p42
    %s45 = sadd.s32 %s44, 1
    %p48 = scmp.eq.s32.totalorder %s10, 15
    %p49 = scmp.ne.s32.totalorder %s44, %s46
    %p50 = scmp.eq.s32.totalorder %s10, 0
    %p51 = por %p49, %p50
    %p52 = scmp.ne.s32.totalorder %s44, %s46
    %p53 = scmp.eq.s32.totalorder %s15, 15
    %p54 = por %p52, %p53
    %p55 = scmp.ne.s32.totalorder %s46, %s47
    %p56 = scmp.eq.s32.totalorder %s15, 0
    %p57 = por %p55, %p56
    %p58 = scmp.ne.s32.totalorder %s46, %s47
    %p59 = scmp.eq.s32.totalorder %s16, 15
    %p60 = por %p58, %p59
    %p62 = scmp.ne.s32.totalorder %s47, %s61
    %p63 = scmp.eq.s32.totalorder %s16, 0
    %p64 = por %p62, %p63
    %s66 = sadd.s32 %s65, 1
    %p69 = scmp.eq.s32.totalorder %s10, 15
    %p70 = scmp.ne.s32.totalorder %s65, %s67
    %p71 = scmp.eq.s32.totalorder %s10, 0
    %p72 = por %p70, %p71
    %p73 = scmp.ne.s32.totalorder %s65, %s67
    %p74 = scmp.eq.s32.totalorder %s15, 15
    %p75 = por %p73, %p74
    %p76 = scmp.ne.s32.totalorder %s67, %s68
    %p77 = scmp.eq.s32.totalorder %s15, 0
    %p78 = por %p76, %p77
    %p79 = scmp.ne.s32.totalorder %s67, %s68
    %p80 = scmp.eq.s32.totalorder %s16, 15
    %p81 = por %p79, %p80
    %p83 = scmp.ne.s32.totalorder %s68, %s82
    %p84 = scmp.eq.s32.totalorder %s16, 0
    %p85 = por %p83, %p84
    %s87 = sadd.s32 %s86, 1
    %p90 = scmp.eq.s32.totalorder %s10, 15
    %p91 = scmp.ne.s32.totalorder %s86, %s88
    %p92 = scmp.eq.s32.totalorder %s10, 0
    %p93 = por %p91, %p92
    %p94 = scmp.ne.s32.totalorder %s86, %s88
    %p95 = scmp.eq.s32.totalorder %s15, 15
    %p96 = por %p94, %p95
    %p97 = scmp.ne.s32.totalorder %s88, %s89
    %p98 = scmp.eq.s32.totalorder %s15, 0
    %p99 = por %p97, %p98
    %p100 = scmp.ne.s32.totalorder %s88, %s89
    %p101 = scmp.eq.s32.totalorder %s16, 15
    %p102 = por %p100, %p101
    %p104 = scmp.ne.s32.totalorder %s89, %s103
    %p105 = scmp.eq.s32.totalorder %s16, 0
    %p106 = por %p104, %p105
    %s107 = ssub.s32 %s10, %s17
    %p108 = scmp.eq.s32.totalorder %s107, 0
    %s110 = sadd.s32 %s109, 1
    %s111 = scalar_select %p108, %s109, %s110
    %p114 = pneg %p108
    %p115 = scmp.eq.s32.totalorder %s10, 15
    %p116 = por %p114, %p115
    %p117 = scmp.ne.s32.totalorder %s109, %s112
    %p118 = scmp.eq.s32.totalorder %s10, 0
    %p119 = por %p117, %p118
    %p120 = scmp.ne.s32.totalorder %s109, %s112
    %p121 = scmp.eq.s32.totalorder %s15, 15
    %p122 = por %p120, %p121
    %p123 = scmp.ne.s32.totalorder %s112, %s113
    %p124 = scmp.eq.s32.totalorder %s15, 0
    %p125 = por %p123, %p124
    %p126 = scmp.ne.s32.totalorder %s112, %s113
    %p127 = scmp.eq.s32.totalorder %s16, 15
    %p128 = por %p126, %p127
    %p130 = scmp.ne.s32.totalorder %s113, %s129
    %p131 = scmp.eq.s32.totalorder %s16, 0
    %p132 = por %p130, %p131
    %p133 = scmp.le.s32.totalorder 1, %s10
    %p134 = scmp.lt.s32.totalorder %s10, 17
    %p135 = pnand %p133, %p134
    %p136 = pneg %p135
    // Predicated region
    $region9: #{transition_block.1} parent=5 // pred_check
      _
    $region10: #{transition_block.1} parent=5 // pred_check_branch
      %138 = sbr.rel (%p135) target = $region12
    $region11: #{transition_block.1} parent=5 // pred_region
      %s139 = ssub.s32 %s10, 1
      // Predicated region
      $region13: #{transition_block.1} parent=11 // pred_check
        %p140 = pneg %p57
      $region14: #{transition_block.1} parent=11 // pred_check_branch
        %142 = sbr.rel (%p140) target = $region16
      $region15: #{transition_block.1} parent=11 // pred_region
        _
      $region16: #{transition_block.1} parent=11 // pred_fallthru
        _
      // Predicated region
      $region17: #{transition_block.1} parent=11 // pred_check
        %p143 = pneg %p78
      $region18: #{transition_block.1} parent=11 // pred_check_branch
        %145 = sbr.rel (%p143) target = $region20
      $region19: #{transition_block.1} parent=11 // pred_region
        _
      $region20: #{transition_block.1} parent=11 // pred_fallthru
        _
      // Predicated region
      $region21: #{transition_block.1} parent=11 // pred_check
        %p146 = pneg %p99
      $region22: #{transition_block.1} parent=11 // pred_check_branch
        %148 = sbr.rel (%p146) target = $region24
      $region23: #{transition_block.1} parent=11 // pred_region
        _
      $region24: #{transition_block.1} parent=11 // pred_fallthru
        _
    $region12: #{transition_block.1} parent=5 // pred_fallthru
      _
    %p149 = scmp.lt.s32.totalorder %s10, 16
    // Predicated region
    $region25: #{transition_block.1} parent=5 // pred_check
      %p150 = pneg %p149
    $region26: #{transition_block.1} parent=5 // pred_check_branch
      %152 = sbr.rel (%p150) target = $region28
    $region27: #{transition_block.1} parent=5 // pred_region
      // Predicated region
      $region29: #{transition_block.1} parent=27 // pred_check
        %p153 = pneg %p30
      $region30: #{transition_block.1} parent=27 // pred_check_branch
        %155 = sbr.rel (%p153) target = $region32
      $region31: #{transition_block.1} parent=27 // pred_region
        %p156 = scmp.lt.s32.totalorder %s10, 15
        %s157 = scalar_select %p156, %s10, 15
        %s158 = smul.addr %s157, 4
        %s159 = scalar_lea.vmem %s0, %s158
      $region32: #{transition_block.1} parent=27 // pred_fallthru
        _
    $region28: #{transition_block.1} parent=5 // pred_fallthru
      _
    %p160 = scmp.le.s32.totalorder 1, %s10
    %p161 = scmp.lt.s32.totalorder %s10, 17
    %p162 = pnand %p160, %p161
    %p163 = pneg %p162
    // Predicated region
    $region33: #{transition_block.1} parent=5 // pred_check
      _
    $region34: #{transition_block.1} parent=5 // pred_check_branch
      %165 = sbr.rel (%p162) target = $region36
    $region35: #{transition_block.1} parent=5 // pred_region
      %s166 = ssub.s32 %s10, 1
      %p167 = scmp.lt.s32.totalorder %s15, 15
      %s168 = scalar_select %p167, %s15, 15
      %s169 = smul.addr %s168, 4
      %s170 = scalar_lea.vmem %s0, %s169
      %p171 = pneg %p36
      %p172 = pneg %p33
      %p173 = pneg %p57
      %p174 = pneg %p54
      %p175 = pneg %p78
      %p176 = pneg %p75
      %p177 = pneg %p99
      %p178 = pneg %p96
      %p179 = pneg %p125
      %p180 = pneg %p122
      %p181 = scmp.lt.s32.totalorder %s15, 15
      %s182 = scalar_select %p181, %s15, 15
      %s183 = smul.addr %s182, 8
      %s184 = scalar_lea.vmem %s4, %s183
      %p185 = scmp.lt.s32.totalorder %s15, 15
      %s186 = scalar_select %p185, %s15, 15
      %s187 = smul.addr %s186, 4
      %s188 = scalar_lea.vmem %s0, %s187
      %p189 = scmp.lt.s32.totalorder %s15, 15
      %s190 = scalar_select %p189, %s15, 15
      %s191 = smul.addr %s190, 8
      %s192 = scalar_lea.vmem %s4, %s191
      %v194 = vld [vmem:[%s188] sm:$0xf]
      %v195 = vunpack.c.l.bf16 %v194
      %v196 = vld [vmem:[%s1] sm:$0x1]
      %v198 = vlaneseq
      %v199 = vshrl.u32 %v198, 7
      %v200 = vsub.s32 0, %v199
      %v201 = vrot.slane %v196, %v200
      %v203 = vmul.f32 %v195, %v201
      %v204 = vld [vmem:[%s2] sm:$0x1]
      %v206 = vlaneseq
      %v207 = vshrl.u32 %v206, 7
      %v208 = vsub.s32 0, %v207
      %v209 = vrot.slane %v204, %v208
      %v211 = vadd.f32 %v203, %v209
      %v212 = vmax.f32 %v211, 0.0
      %v213 = vpack.c.bf16 %v212, %v212
      %v214 = vld [vmem:[%s3] sm:$0xf]
      %v215 = vld [vmem:[%s3 + $0x4] sm:$0xf]
      %v218 = vunpack.c.l.b16 %v214
      %v219 = vunpack.c.l.b16 %v215
      %v220 = vpack.c.b16 %v219, %v218
      %vm222 = vcmask 130048
      %v224 = vsel %vm222, %v213, 0
      %226 = vmatprep.subr.bf16.mxu0 0
      %227 = vmatpush1.bf16.msra.mxu0 %v220
      %228 = vmatprep.subr.bf16.mxu0 0
      %229 = vmatpush1.bf16.msra.mxu0 0
      %230 = vmatprep.subr.bf16.mxu0 0
      %231 = vmatpush1.bf16.msra.mxu0 0
      %232 = vmatprep.subr.bf16.mxu0 0
      %233 = vmatpush1.bf16.msra.mxu0 0
      %234 = vmatprep.subr.bf16.mxu0 0
      %235 = vmatpush1.bf16.msra.mxu0 0
      %236 = vmatprep.subr.bf16.mxu0 0
      %237 = vmatpush1.bf16.msra.mxu0 0
      %238 = vmatprep.subr.bf16.mxu0 0
      %239 = vmatpush1.bf16.msra.mxu0 0
      %240 = vmatprep.subr.bf16.mxu0 0
      %241 = vmatpush1.bf16.msra.mxu0 0
      %242 = vmatprep.subr.bf16.mxu0 0
      %243 = vmatpush1.bf16.msra.mxu0 0
      %244 = vmatprep.subr.bf16.mxu0 0
      %245 = vmatpush1.bf16.msra.mxu0 0
      %246 = vmatprep.subr.bf16.mxu0 0
      %247 = vmatpush1.bf16.msra.mxu0 0
      %248 = vmatprep.subr.bf16.mxu0 0
      %249 = vmatpush1.bf16.msra.mxu0 0
      %250 = vmatprep.subr.bf16.mxu0 0
      %251 = vmatpush1.bf16.msra.mxu0 0
      %252 = vmatprep.subr.bf16.mxu0 0
      %253 = vmatpush1.bf16.msra.mxu0 0
      %254 = vmatprep.subr.bf16.mxu0 0
      %255 = vmatpush1.bf16.msra.mxu0 0
      %256 = vmatprep.subr.bf16.mxu0 0
      %257 = vmatpush1.bf16.msra.mxu0 0
      %258 = vmatprep.mubr.bf16.mxu0 0
      %259 = vmatmul.mubr.bf16.gmra.mrb[0].mxu0 %v224
      %v260 = vpop.f32.mrb[0].mxu0
      %v261 = vadd.f32 0.0, %v260
      %v262 = vpop.f32.mrb[0].mxu0
      %v263 = vpop.f32.mrb[0].mxu0
      %v264 = vpop.f32.mrb[0].mxu0
      %265 = vdwg.mxu0
      %266 = vst [vmem:[%s192] sm:$0xff] %v261
      %p267 = scmp.lt.s32.totalorder %s15, 15
      %s268 = scalar_select %p267, %s15, 15
      %s269 = smul.addr %s268, 8
      %s270 = scalar_lea.vmem %s4, %s269
      // Predicated region
      $region37: #{transition_block.1} parent=35 // pred_check
        %p271 = pneg %p122
      $region38: #{transition_block.1} parent=35 // pred_check_branch
        %273 = sbr.rel (%p271) target = $region40
      $region39: #{transition_block.1} parent=35 // pred_region
        _
      $region40: #{transition_block.1} parent=35 // pred_fallthru
        _
    $region36: #{transition_block.1} parent=5 // pred_fallthru
      _
    %p274 = scmp.le.s32.totalorder 2, %s10
    // Predicated region
    $region41: #{transition_block.1} parent=5 // pred_check
      %p275 = pneg %p274
    $region42: #{transition_block.1} parent=5 // pred_check_branch
      %277 = sbr.rel (%p275) target = $region44
    $region43: #{transition_block.1} parent=5 // pred_region
      %s278 = ssub.s32 %s10, 2
      // Predicated region
      $region45: #{transition_block.1} parent=43 // pred_check
        %p279 = pneg %p128
      $region46: #{transition_block.1} parent=43 // pred_check_branch
        %281 = sbr.rel (%p279) target = $region48
      $region47: #{transition_block.1} parent=43 // pred_region
        %p282 = scmp.lt.s32.totalorder %s16, 15
        %s283 = scalar_select %p282, %s16, 15
        %s284 = smul.addr %s283, 8
        %s285 = scalar_lea.vmem %s4, %s284
      $region48: #{transition_block.1} parent=43 // pred_fallthru
        _
    $region44: #{transition_block.1} parent=5 // pred_fallthru
      _
  $region6: #{transition_block.1} parent=0 // loop_footer
    %s14 = sadd.s32 1, %s10
  $region7: #{transition_block.1} parent=0 // loop_footer_branch
    %9 = sbr.rel target = $region3
  $region8: #{transition_block.1} parent=0 // loop_exit
    _

</llo_original>
